<compile_context>
chip_gen: v6e
topology: v6e:2x2x1
jax: 0.10.0
libtpu: 0.0.40
codegen_flags: <defaults>
</compile_context>

<pallas_src>
import jax
import jax.numpy as jnp
from jax import lax
from jax.experimental import pallas as pl
from jax.experimental.pallas import tpu as pltpu


def _round_up(n, m):
    return ((n + m - 1) // m) * m


def _mlp_kernel(x_ref, w1_ref, b1_ref, w2_ref, b2_ref, o_ref):
    # Hidden layer, computed transposed (batch on the lane axis):
    #   W1 (n_hidden, n_in)  contracted with  x (tile_b, n_in)  on the trailing
    #   n_in axis of BOTH operands -> (n_hidden, tile_b). No explicit transpose
    #   of x is ever materialized in HBM or as a separate kernel op.
    hT = lax.dot_general(
        w1_ref[...], x_ref[...],
        dimension_numbers=(((1,), (1,)), ((), ())),
        preferred_element_type=jnp.float32,
    )
    hT = jnp.tanh(hT + b1_ref[...])                       # b1 (n_hidden, 1), lane-broadcast
    # Output layer (n_hidden -> 1): VPU multiply + sublane (XLU) reduction
    # instead of an M=1/N=1 MXU matmul.
    z = jnp.sum(hT * w2_ref[...], axis=0, keepdims=True) + b2_ref[...]   # (1, tile_b)
    o_ref[...] = jax.nn.sigmoid(z).astype(o_ref.dtype)


def classification_network_forward(x, w1, b1, w2, b2, *, tile_b=8192):
    """Forward pass.

    x  : (B, n_inputs)        f32   (native PyTorch layout, fed as-is)
    w1 : (n_hidden, n_inputs) f32   (== torch Linear.weight of layer 1)
    b1 : (n_hidden, 1)        f32   (== torch Linear.bias of layer 1, as a column)
    w2 : (n_hidden, 1)        f32   (== torch Linear.weight of layer 2, transposed)
    b2 : (1, 1)               f32
    returns (B, 1) f32
    """
    B, n_in = x.shape
    n_hidden = w1.shape[0]

    if B <= 256:
        # Single full-extent block: block dims == array dims are always legal,
        # and a tiny batch gains nothing from tiling.
        tile_b = B
    else:
        # Multiple of 128 (lane-dense output block, sublane-aligned x block).
        # Cap at ~half the batch so the "parallel" grid axis has >= 2 steps
        # (v7x megacore), and at tile_b<=8192 so the lane-padded (tile_b, n_in)
        # x double-buffers stay ~8 MiB of VMEM.
        tile_b = max(128, min(tile_b, _round_up(pl.cdiv(B, 2), 128)))
    grid = (pl.cdiv(B, tile_b),)

    out_t = pl.pallas_call(
        _mlp_kernel,
        out_shape=jax.ShapeDtypeStruct((1, B), jnp.float32),
        grid_spec=pltpu.PrefetchScalarGridSpec(
            num_scalar_prefetch=0,
            grid=grid,
            in_specs=[
                pl.BlockSpec((tile_b, n_in), lambda i: (i, 0)),      # x tile (pipelined, native layout)
                pl.BlockSpec((n_hidden, n_in), lambda i: (0, 0)),    # W1 (resident)
                pl.BlockSpec((n_hidden, 1), lambda i: (0, 0)),       # b1 (resident)
                pl.BlockSpec((n_hidden, 1), lambda i: (0, 0)),       # w2 (resident)
                pl.BlockSpec((1, 1), lambda i: (0, 0)),              # b2 (resident)
            ],
            out_specs=pl.BlockSpec((1, tile_b), lambda i: (0, i)),   # lane-dense output
        ),
        compiler_params=pltpu.CompilerParams(
            dimension_semantics=("parallel",),        # megacore sharding on v7x
            vmem_limit_bytes=32 * 1024 * 1024,        # explicit; safe on v5e/v6e/v7x
        ),
    )(x, w1, b1, w2, b2)

    # (1, B) -> (B, 1): contiguous reshape, no data movement.
    return out_t.reshape(B, 1)


def init_params(key, n_inputs, n_hidden):
    """Deterministic init mirroring torch.nn.Linear default (U(-1/sqrt(fan_in), +))."""
    k1, k2, k3, k4 = jax.random.split(key, 4)
    bound1 = 1.0 / jnp.sqrt(n_inputs)
    bound2 = 1.0 / jnp.sqrt(n_hidden)
    w1 = jax.random.uniform(k1, (n_hidden, n_inputs), jnp.float32, -bound1, bound1)
    b1 = jax.random.uniform(k2, (n_hidden, 1), jnp.float32, -bound1, bound1)
    w2 = jax.random.uniform(k3, (n_hidden, 1), jnp.float32, -bound2, bound2)
    b2 = jax.random.uniform(k4, (1, 1), jnp.float32, -bound2, bound2)
    return w1, b1, w2, b2


def _reference(x, w1, b1, w2, b2):
    h = jnp.tanh(x @ w1.T + b1.T)
    return jax.nn.sigmoid(h @ w2 + b2)


if __name__ == "__main__":
    key = jax.random.PRNGKey(0)
    kx, kp, kx2 = jax.random.split(key, 3)

    n_inputs = 4
    n_hidden = 32
    w1, b1, w2, b2 = init_params(kp, n_inputs, n_hidden)

    # Small batch: single full-extent block path.
    batch = 8
    x = jax.random.normal(kx, (batch, n_inputs), jnp.float32)
    y = jax.block_until_ready(classification_network_forward(x, w1, b1, w2, b2))
    y_ref = _reference(x, w1, b1, w2, b2)
    assert y.shape == (batch, 1)
    assert jnp.allclose(y, y_ref, atol=1e-5, rtol=1e-5)

    # Larger, non-divisible batch: exercises the tiled grid + ragged final
    # block (masked output writeback).
    batch2 = 300
    x2 = jax.random.normal(kx2, (batch2, n_inputs), jnp.float32)
    y2 = jax.block_until_ready(classification_network_forward(x2, w1, b1, w2, b2))
    y2_ref = _reference(x2, w1, b1, w2, b2)
    assert y2.shape == (batch2, 1)
    assert jnp.allclose(y2, y2_ref, atol=1e-5, rtol=1e-5)

    print("KERNEL_OK")
</pallas_src>

<mosaic_0001>
module attributes {stable_mosaic.version = 11 : i64} {
  func.func @_mlp_kernel(%arg0: i32, %arg1: memref<8x4xf32, #tpu.memory_space<vmem>>, %arg2: memref<32x4xf32, #tpu.memory_space<vmem>>, %arg3: memref<32x1xf32, #tpu.memory_space<vmem>>, %arg4: memref<32x1xf32, #tpu.memory_space<vmem>>, %arg5: memref<1x1xf32, #tpu.memory_space<vmem>>, %arg6: memref<1x8xf32, #tpu.memory_space<vmem>>) attributes {dimension_semantics = [#tpu.dimension_semantics<parallel>], iteration_bounds = array<i64: 1>, scalar_prefetch = 0 : i64, scratch_operands = 0 : i64, tpu.core_type = #tpu.core_type<tc>, window_params = [{transform_indices = @transform_0, window_bounds = array<i64: 8, 4>}, {pipeline_mode = #tpu.pipeline_mode<synchronous>, transform_indices = @transform_1, window_bounds = array<i64: 32, 4>}, {pipeline_mode = #tpu.pipeline_mode<synchronous>, transform_indices = @transform_2, window_bounds = array<i64: 32, 1>}, {pipeline_mode = #tpu.pipeline_mode<synchronous>, transform_indices = @transform_3, window_bounds = array<i64: 32, 1>}, {pipeline_mode = #tpu.pipeline_mode<synchronous>, transform_indices = @transform_4, window_bounds = array<i64: 1, 1>}, {transform_indices = @transform_5, window_bounds = array<i64: 1, 8>}]} {
    %c0 = arith.constant 0 : index
    %c0_0 = arith.constant 0 : index
    %0 = vector.load %arg2[%c0, %c0_0] : memref<32x4xf32, #tpu.memory_space<vmem>>, vector<32x4xf32>
    %c0_1 = arith.constant 0 : index
    %c0_2 = arith.constant 0 : index
    %1 = vector.load %arg1[%c0_1, %c0_2] : memref<8x4xf32, #tpu.memory_space<vmem>>, vector<8x4xf32>
    %cst = arith.constant dense<0.000000e+00> : vector<32x8xf32>
    %2 = tpu.matmul %0, %1, %cst {dimension_numbers = #tpu.dot_dimension_numbers<[1], [1], [0], [0], [0, 0, 1, 0], [], []>} : vector<32x4xf32>, vector<8x4xf32>, vector<32x8xf32> -> vector<32x8xf32>
    %c0_3 = arith.constant 0 : index
    %c0_4 = arith.constant 0 : index
    %3 = vector.load %arg3[%c0_3, %c0_4] : memref<32x1xf32, #tpu.memory_space<vmem>>, vector<32x1xf32>
    %4 = vector.broadcast %3 : vector<32x1xf32> to vector<32x8xf32>
    %5 = arith.addf %2, %4 : vector<32x8xf32>
    %6 = math.tanh %5 : vector<32x8xf32>
    %c0_5 = arith.constant 0 : index
    %c0_6 = arith.constant 0 : index
    %7 = vector.load %arg4[%c0_5, %c0_6] : memref<32x1xf32, #tpu.memory_space<vmem>>, vector<32x1xf32>
    %8 = vector.broadcast %7 : vector<32x1xf32> to vector<32x8xf32>
    %9 = arith.mulf %6, %8 : vector<32x8xf32>
    %cst_7 = arith.constant dense<0.000000e+00> : vector<8xf32>
    %10 = vector.multi_reduction <add>, %9, %cst_7 [0] : vector<32x8xf32> to vector<8xf32>
    %11 = vector.shape_cast %10 : vector<8xf32> to vector<1x8xf32>
    %c0_8 = arith.constant 0 : index
    %c0_9 = arith.constant 0 : index
    %12 = vector.load %arg5[%c0_8, %c0_9] : memref<1x1xf32, #tpu.memory_space<vmem>>, vector<1x1xf32>
    %13 = vector.broadcast %12 : vector<1x1xf32> to vector<1x8xf32>
    %14 = arith.addf %11, %13 : vector<1x8xf32>
    %15 = arith.negf %14 : vector<1x8xf32>
    %16 = math.exp %15 : vector<1x8xf32>
    %cst_10 = arith.constant 1.000000e+00 : f32
    %17 = vector.broadcast %cst_10 : f32 to vector<1x8xf32>
    %18 = arith.addf %17, %16 : vector<1x8xf32>
    %19 = arith.divf %17, %18 : vector<1x8xf32>
    %c0_11 = arith.constant 0 : index
    %c0_12 = arith.constant 0 : index
    %20 = vector.load %arg6[%c0_11, %c0_12] : memref<1x8xf32, #tpu.memory_space<vmem>>, vector<1x8xf32>
    tpu.vector_store %arg6[%c0_11, %c0_12], %19 {strides = array<i32>} : memref<1x8xf32, #tpu.memory_space<vmem>>, vector<1x8xf32>,
    return
  }
  func.func @transform_0(%arg0: i32) -> (i32, i32) {
    %c0_i32 = arith.constant 0 : i32
    %c0_i32_0 = arith.constant 0 : i32
    return %arg0, %c0_i32 : i32, i32
  }
  func.func @transform_1(%arg0: i32) -> (i32, i32) {
    %c0_i32 = arith.constant 0 : i32
    %c0_i32_0 = arith.constant 0 : i32
    %c0_i32_1 = arith.constant 0 : i32
    return %c0_i32, %c0_i32_0 : i32, i32
  }
  func.func @transform_2(%arg0: i32) -> (i32, i32) {
    %c0_i32 = arith.constant 0 : i32
    %c0_i32_0 = arith.constant 0 : i32
    %c0_i32_1 = arith.constant 0 : i32
    return %c0_i32, %c0_i32_0 : i32, i32
  }
  func.func @transform_3(%arg0: i32) -> (i32, i32) {
    %c0_i32 = arith.constant 0 : i32
    %c0_i32_0 = arith.constant 0 : i32
    %c0_i32_1 = arith.constant 0 : i32
    return %c0_i32, %c0_i32_0 : i32, i32
  }
  func.func @transform_4(%arg0: i32) -> (i32, i32) {
    %c0_i32 = arith.constant 0 : i32
    %c0_i32_0 = arith.constant 0 : i32
    %c0_i32_1 = arith.constant 0 : i32
    return %c0_i32, %c0_i32_0 : i32, i32
  }
  func.func @transform_5(%arg0: i32) -> (i32, i32) {
    %c0_i32 = arith.constant 0 : i32
    %c0_i32_0 = arith.constant 0 : i32
    return %c0_i32, %arg0 : i32, i32
  }
}

</mosaic_0001>

<llo_original>
// kernel: tpu_custom_call.1
$region0: #{tpu_custom_call.1}
  #allocation0 [shape = 'u32[]', space=smem, size = 0x4, offset = 0x4, fixed_abs, tag = 'smem constant byte address 0x4 - core index']
  #allocation1 [shape = 'u32[144,128]{1,0:T(1,128)}', space=vmem, size = 0x12000, scoped, tag = 'internal scratch']
  #allocation2 [shape = 'f32[1,1]{1,0:T(1,128)S(1)}', space=vmem, size = 0x200, scoped, tag = 'scoped memory for tpu_custom_call.1']
  %s0 = inlined_call_operand.vmem [shape: f32[8,4], index: 0, kind: input, shape index: {}]
  %s1 = inlined_call_operand.vmem [shape: f32[32,4], index: 1, kind: input, shape index: {}]
  %s2 = inlined_call_operand.vmem [shape: f32[32,1], index: 2, kind: input, shape index: {}]
  %s3 = inlined_call_operand.vmem [shape: f32[32,1], index: 3, kind: input, shape index: {}]
  %s4 = inlined_call_operand.<no memory space> [shape: f32[1,1], index: 4, kind: input, shape index: {}]
  %s5 = inlined_call_operand.hbm [shape: f32[1,8], index: 5, kind: output, shape index: {}]
  %s6 = sld [smem:[#allocation0]]
  $region30: #{tpu_custom_call.1} parent=0
    _
  %s8 = ssub.s32 1, %s6
  %s9 = scalar_select 0, %s8, %s6
  %v10 = vstv %s4
  %11 = vst [vmem:[#allocation2] sm:$0x1] %v10
  $region1: #{tpu_custom_call.1} parent=0
    #allocation3 [shape = 'u8[512]{0}', space=vmem, size = 0x400, scoped, tag = 'output window, operand 0, single buffered']
    #allocation4 [shape = 's32[1]{0}', space=sflag, size = 0x4, scoped, tag = 'scoped memory for tpu_custom_call.1']
    %12 = vsyncpa [#allocation4], 0
    // Predicated region
    $region2: #{tpu_custom_call.1} parent=1 // pred_check
      _
    $region3: #{tpu_custom_call.1} parent=1 // pred_check_branch
      %14 = sbr.rel (0) target = $region5
    $region4: #{tpu_custom_call.1} parent=1 // pred_region
      _
    $region5: #{tpu_custom_call.1} parent=1 // pred_fallthru
      _
    // Predicated region
    $region6: #{tpu_custom_call.1} parent=1 // pred_check
      _
    $region7: #{tpu_custom_call.1} parent=1 // pred_check_branch
      %16 = sbr.rel (0) target = $region9
    $region8: #{tpu_custom_call.1} parent=1 // pred_region
      _
    $region9: #{tpu_custom_call.1} parent=1 // pred_fallthru
      _
    // Predicated region
    $region10: #{tpu_custom_call.1} parent=1 // pred_check
      _
    $region11: #{tpu_custom_call.1} parent=1 // pred_check_branch
      %18 = sbr.rel (0) target = $region13
    $region12: #{tpu_custom_call.1} parent=1 // pred_region
      _
    $region13: #{tpu_custom_call.1} parent=1 // pred_fallthru
      _
    // Predicated region
    $region14: #{tpu_custom_call.1} parent=1 // pred_check
      _
    $region15: #{tpu_custom_call.1} parent=1 // pred_check_branch
      %20 = sbr.rel (0) target = $region17
    $region16: #{tpu_custom_call.1} parent=1 // pred_region
      _
    $region17: #{tpu_custom_call.1} parent=1 // pred_fallthru
      _
    // Predicated region
    $region18: #{tpu_custom_call.1} parent=1 // pred_check
      _
    $region19: #{tpu_custom_call.1} parent=1 // pred_check_branch
      %22 = sbr.rel (0) target = $region21
    $region20: #{tpu_custom_call.1} parent=1 // pred_region
      _
    $region21: #{tpu_custom_call.1} parent=1 // pred_fallthru
      _
    %v23 = vld [vmem:[%s1] sm:$0xff]
    %v24 = vld [vmem:[%s1 + $0x8] sm:$0xff]
    %v25 = vld [vmem:[%s1 + $0x10] sm:$0xff]
    %v26 = vld [vmem:[%s1 + $0x18] sm:$0xff]
    %v27 = vld [vmem:[%s0] sm:$0xff]
    %v28 = vld [vmem:[%s2] sm:$0xff]
    %v29 = vld [vmem:[%s2 + $0x8] sm:$0xff]
    %v30 = vld [vmem:[%s2 + $0x10] sm:$0xff]
    %v31 = vld [vmem:[%s2 + $0x18] sm:$0xff]
    %33 = vset.pattern.permute.xlu0 0
    %34 = vperm.xlu0 %33, %v28
    %v35 = vpop.permute.xlu0 %34
    %38 = vset.pattern.permute.xlu0 0
    %39 = vperm.xlu0 %38, %v29
    %v40 = vpop.permute.xlu0 %39
    %43 = vset.pattern.permute.xlu0 0
    %44 = vperm.xlu0 %43, %v30
    %v45 = vpop.permute.xlu0 %44
    %48 = vset.pattern.permute.xlu0 0
    %49 = vperm.xlu0 %48, %v31
    %v50 = vpop.permute.xlu0 %49
    %vm52 = vcmask 31744
    %v54 = vsel %vm52, %v23, 0
    %v57 = vsel %vm52, %v24, 0
    %v60 = vsel %vm52, %v25, 0
    %v63 = vsel %vm52, %v26, 0
    %v66 = vsel %vm52, %v27, 0
    %68 = vmatprep.subr.mxu0 0.0
    %69 = vmatpush1.xpose.msra.mxu0 0.0
    %70 = vmatprep.subr.mxu0 0.0
    %71 = vmatpush1.xpose.msra.mxu0 0.0
    %72 = vmatprep.subr.mxu0 0.0
    %73 = vmatpush1.xpose.msra.mxu0 0.0
    %74 = vmatprep.subr.mxu0 0.0
    %75 = vmatpush1.xpose.msra.mxu0 0.0
    %76 = vmatprep.subr.mxu0 0.0
    %77 = vmatpush1.xpose.msra.mxu0 0.0
    %78 = vmatprep.subr.mxu0 0.0
    %79 = vmatpush1.xpose.msra.mxu0 0.0
    %80 = vmatprep.subr.mxu0 0.0
    %81 = vmatpush1.xpose.msra.mxu0 0.0
    %82 = vmatprep.subr.mxu0 0.0
    %83 = vmatpush1.xpose.msra.mxu0 0.0
    %84 = vmatprep.subr.mxu0 0.0
    %85 = vmatpush1.xpose.msra.mxu0 0.0
    %86 = vmatprep.subr.mxu0 0.0
    %87 = vmatpush1.xpose.msra.mxu0 0.0
    %88 = vmatprep.subr.mxu0 0.0
    %89 = vmatpush1.xpose.msra.mxu0 0.0
    %90 = vmatprep.subr.mxu0 0.0
    %91 = vmatpush1.xpose.msra.mxu0 0.0
    %92 = vmatprep.subr.mxu0 0.0
    %93 = vmatpush1.xpose.msra.mxu0 0.0
    %94 = vmatprep.subr.mxu0 0.0
    %95 = vmatpush1.xpose.msra.mxu0 0.0
    %96 = vmatprep.subr.mxu0 0.0
    %97 = vmatpush1.xpose.msra.mxu0 0.0
    %98 = vmatprep.subr.mxu0 0.0
    %99 = vmatpush1.xpose.msra.mxu0 %v66
    %100 = vmatprep.subr.mxu0 0.0
    %101 = vmatpush2.xpose.msra.mxu0 0.0
    %102 = vmatprep.subr.mxu0 0.0
    %103 = vmatpush2.xpose.msra.mxu0 0.0
    %104 = vmatprep.subr.mxu0 0.0
    %105 = vmatpush2.xpose.msra.mxu0 0.0
    %106 = vmatprep.subr.mxu0 0.0
    %107 = vmatpush2.xpose.msra.mxu0 0.0
    %108 = vmatprep.subr.mxu0 0.0
    %109 = vmatpush2.xpose.msra.mxu0 0.0
    %110 = vmatprep.subr.mxu0 0.0
    %111 = vmatpush2.xpose.msra.mxu0 0.0
    %112 = vmatprep.subr.mxu0 0.0
    %113 = vmatpush2.xpose.msra.mxu0 0.0
    %114 = vmatprep.subr.mxu0 0.0
    %115 = vmatpush2.xpose.msra.mxu0 0.0
    %116 = vmatprep.subr.mxu0 0.0
    %117 = vmatpush2.xpose.msra.mxu0 0.0
    %118 = vmatprep.subr.mxu0 0.0
    %119 = vmatpush2.xpose.msra.mxu0 0.0
    %120 = vmatprep.subr.mxu0 0.0
    %121 = vmatpush2.xpose.msra.mxu0 0.0
    %122 = vmatprep.subr.mxu0 0.0
    %123 = vmatpush2.xpose.msra.mxu0 0.0
    %124 = vmatprep.subr.mxu0 0.0
    %125 = vmatpush2.xpose.msra.mxu0 0.0
    %126 = vmatprep.subr.mxu0 0.0
    %127 = vmatpush2.xpose.msra.mxu0 0.0
    %128 = vmatprep.subr.mxu0 0.0
    %129 = vmatpush2.xpose.msra.mxu0 0.0
    %130 = vmatprep.subr.mxu0 0.0
    %131 = vmatpush2.xpose.msra.mxu0 0.0
    %132 = vmatprep.mubr.f32.mxu0 0.0
    %133 = vmatmul.mubr.f32.gmra.mxu0 %v54
    %v134 = vpop.f32.mrf.mxu0
    %v135 = vadd.f32 %v35, %v134
    %v136 = vpop.f32.mrf.mxu0
    %137 = vmatprep.mubr.f32.mxu0 0.0
    %138 = vmatmul.mubr.f32.gmra.mxu0 %v57
    %v139 = vpop.f32.mrf.mxu0
    %v140 = vadd.f32 %v40, %v139
    %v141 = vpop.f32.mrf.mxu0
    %142 = vmatprep.mubr.f32.mxu0 0.0
    %143 = vmatmul.mubr.f32.gmra.mxu0 %v60
    %v144 = vpop.f32.mrf.mxu0
    %v145 = vadd.f32 %v45, %v144
    %v146 = vpop.f32.mrf.mxu0
    %147 = vmatprep.mubr.f32.mxu0 0.0
    %148 = vmatmul.mubr.f32.gmra.mxu0 %v63
    %v149 = vpop.f32.mrf.mxu0
    %v150 = vadd.f32 %v50, %v149
    %v151 = vpop.f32.mrf.mxu0
    %152 = vdwg.mxu0
    %v153 = vtanh.pop %v135
    %v154 = vtanh.pop %v140
    %v155 = vtanh.pop %v145
    %v156 = vtanh.pop %v150
    %v157 = vld [vmem:[%s3] sm:$0xff]
    %v158 = vld [vmem:[%s3 + $0x8] sm:$0xff]
    %v159 = vld [vmem:[%s3 + $0x10] sm:$0xff]
    %v160 = vld [vmem:[%s3 + $0x18] sm:$0xff]
    %162 = vset.pattern.permute.xlu0 0
    %163 = vperm.xlu0 %162, %v157
    %v164 = vpop.permute.xlu0 %163
    %167 = vset.pattern.permute.xlu0 0
    %168 = vperm.xlu0 %167, %v158
    %v169 = vpop.permute.xlu0 %168
    %172 = vset.pattern.permute.xlu0 0
    %173 = vperm.xlu0 %172, %v159
    %v174 = vpop.permute.xlu0 %173
    %177 = vset.pattern.permute.xlu0 0
    %178 = vperm.xlu0 %177, %v160
    %v179 = vpop.permute.xlu0 %178
    %v181 = vmul.f32 %v153, %v164
    %v182 = vmul.f32 %v154, %v169
    %v183 = vmul.f32 %v155, %v174
    %v184 = vmul.f32 %v156, %v179
    %vm185 = vcmask 64512
    %v186 = vsel %vm185, %v181, 0.0
    %v187 = vsel %vm185, %v182, 0.0
    %v188 = vadd.f32 %v186, %v187
    %v189 = vsel %vm185, %v183, 0.0
    %v190 = vadd.f32 %v188, %v189
    %v191 = vsel %vm185, %v184, 0.0
    %v192 = vadd.f32 %v190, %v191
    %v193 = vrot.slane %v192, 4
    %v194 = vadd.f32 %v192, %v193
    %v195 = vrot.slane %v194, 2
    %v196 = vadd.f32 %v194, %v195
    %v197 = vrot.slane %v196, 1
    %v198 = vadd.f32 %v196, %v197
    %v199 = vld [vmem:[#allocation2] sm:$0x1]
    %201 = vset.pattern.permute.xlu0 0
    %202 = vperm.xlu0 %201, %v199
    %v203 = vpop.permute.xlu0 %202
    %v205 = vlaneseq
    %v206 = vshrl.u32 %v205, 7
    %v207 = vsub.s32 0, %v206
    %v208 = vrot.slane %v203, %v207
    %v209 = vadd.f32 %v198, %v208
    %v210 = vxor.u32 %v209, 2147483648
    %v211 = vmul.f32 %v210, 1.442695
    %v212 = vpow.pop %v211
    %v213 = vadd.f32 %v212, 1.0
    %v214 = vrcp.pop %v213
    %v215 = vmul.f32 1.0, %v214
    %vm216 = vcmask 57344
    %217 = vst.msk [vmem:[#allocation3] sm:$0x1] %vm216, %v215
    // Predicated region
    $region22: #{tpu_custom_call.1} parent=1 // pred_check
      _
    $region23: #{tpu_custom_call.1} parent=1 // pred_check_branch
      %219 = sbr.rel (0) target = $region25
    $region24: #{tpu_custom_call.1} parent=1 // pred_region
      %s221 = ssub.s32 16, 16
      %222 = vsyncadd [#allocation4], %s221
      %s224 = sshll.u32 [#allocation3], 4
      %s225 = int_to_ptr.vmem [resolvable:$true] %s224
      %227 = dma.vmem_to_hbm [thread:$0]  %s225, 16, %s5, [#allocation4]
    $region25: #{tpu_custom_call.1} parent=1 // pred_fallthru
      _
    // Predicated region
    $region26: #{tpu_custom_call.1} parent=1 // pred_check
      _
    $region27: #{tpu_custom_call.1} parent=1 // pred_check_branch
      %229 = sbr.rel (0) target = $region29
    $region28: #{tpu_custom_call.1} parent=1 // pred_region
      %230 = dma.done [#allocation4], 16
    $region29: #{tpu_custom_call.1} parent=1 // pred_fallthru
      _
    %231 = vsyncpa [#allocation4], 1

</llo_original>
